<compile_context>
chip_gen: v7x
topology: tpu7x:2x2x1
jax: 0.10.0
libtpu: 0.0.40
codegen_flags: <defaults>
</compile_context>

<pallas_src>
from typing import NamedTuple

import jax
import jax.numpy as jnp
from jax import lax
from jax.experimental import pallas as pl
from jax.experimental.pallas import tpu as pltpu

# TODO(synk): the timm 'efficientnet_b2' feature backbone has no clean Pallas
# equivalent here; the kernel takes its output feature map (NHWC) as input.

NUM_DOMAINS = 4
NUM_CATEGORIES = 65
FEATURE_DIM = 352  # timm efficientnet_b2 features_only -> last stage channels
LANE = 128


# --------------------------------------------------------------------------- #
# Kernel
# --------------------------------------------------------------------------- #
def _mtl_head_kernel(feat_ref, w_ref, b_ref, out_ref):
    """Fused global-average-pool + fused (zero-padded) classifier heads.

    feat_ref : (tb, HW, C)  backbone features, channels-last (bf16 or f32)
    w_ref    : (C, 128)     bf16 [w_dom.T | w_cat.T | 0-pad], pre-scaled by 1/HW
    b_ref    : (1, 128)     f32  [b_dom   | b_cat   | 0-pad]
    out_ref  : (tb, 128)    lane-dense fused logits (f32)
    """
    tb, hw, c = feat_ref.shape
    chunk = min(8, hw)
    n_full = hw // chunk
    rem = hw - n_full * chunk

    # Spatial sum, accumulated in f32 over small bf16 chunks — never
    # materializes a full (tb, HW, C) f32 temporary in VMEM.
    def chunk_sum(i, acc):
        start = pl.multiple_of(i * chunk, chunk)
        blk = feat_ref[:, pl.ds(start, chunk), :].astype(jnp.float32)
        return acc + jnp.sum(blk, axis=1)

    pooled = lax.fori_loop(0, n_full, chunk_sum,
                           jnp.zeros((tb, c), jnp.float32))
    if rem:  # static tail (hw not a multiple of 8)
        tail = feat_ref[:, pl.ds(n_full * chunk, rem), :].astype(jnp.float32)
        pooled = pooled + jnp.sum(tail, axis=1)

    # 1/HW is pre-folded into w_ref; bf16 x bf16 MXU matmul, f32 accumulate.
    logits = jnp.dot(pooled.astype(w_ref.dtype), w_ref[...],
                     preferred_element_type=jnp.float32) + b_ref[...]
    out_ref[...] = logits.astype(out_ref.dtype)


# --------------------------------------------------------------------------- #
# Parameter preparation (hoisted out of the per-call path)
# --------------------------------------------------------------------------- #
class FusedHeadParams(NamedTuple):
    w: jax.Array          # (C, n_pad) bf16, both heads fused, pre-scaled by 1/HW
    b: jax.Array          # (1, n_pad) f32
    n_dom: int
    n_cat: int
    spatial_size: int


def prepare_head_params(w_dom, b_dom, w_cat, b_cat, spatial_size):
    """Build the fused, zero-padded, 1/HW-pre-scaled bf16 head weight once.

    w_dom: (num_domains, C), b_dom: (num_domains,)      -- PyTorch Linear layout
    w_cat: (num_categories, C), b_cat: (num_categories,)
    """
    n_dom, c = w_dom.shape
    n_cat, c2 = w_cat.shape
    assert c == c2, "domain / category heads must share the feature dim"
    n_out = n_dom + n_cat
    n_pad = LANE * pl.cdiv(n_out, LANE)  # 69 -> 128 (lane-dense output)

    w_all = jnp.concatenate([w_dom, w_cat], axis=0).astype(jnp.float32)  # (n_out, C)
    w_fused = jnp.zeros((n_pad, c), jnp.float32).at[:n_out].set(w_all)
    # Fold the AdaptiveAvgPool2d 1/HW scale into the weight; store in bf16.
    w_fused = (w_fused.T * (1.0 / float(spatial_size))).astype(jnp.bfloat16)  # (C, n_pad)

    b_all = jnp.concatenate([b_dom, b_cat]).astype(jnp.float32)
    b_fused = jnp.zeros((1, n_pad), jnp.float32).at[0, :n_out].set(b_all)

    return FusedHeadParams(w_fused, b_fused, int(n_dom), int(n_cat), int(spatial_size))


# --------------------------------------------------------------------------- #
# Tiling
# --------------------------------------------------------------------------- #
def _pick_batch_tile(B, per_sample_bytes, *, feat_buffer_budget=24 << 20):
    """Largest batch tile that (a) divides B, (b) is a multiple of 8 (or the
    whole batch), (c) keeps double-buffered feature tiles under the budget,
    and (d) prefers >= 2 grid steps so both v7x TensorCores get work."""
    cands = [d for d in range(8, B + 1, 8) if B % d == 0]
    if not cands:
        return B  # whole batch as one block (satisfies (8,128) rule via full dim)
    fit = [d for d in cands if 2 * d * per_sample_bytes <= feat_buffer_budget]
    if not fit:
        fit = [min(cands)]  # best effort: smallest multiple-of-8 divisor
    tb = max(fit)
    if tb == B:
        two_step = [d for d in fit if d <= B // 2]
        if two_step:
            tb = max(two_step)
    return tb


# --------------------------------------------------------------------------- #
# Wrapper
# --------------------------------------------------------------------------- #
def multitask_heads(features_nhwc, head: FusedHeadParams, *, batch_tile=None):
    """features_nhwc: (B, H, W, C) backbone feature map, channels-last (bf16/f32).

    Returns (domain_preds (B, n_dom), category_preds (B, n_cat)), both f32.
    """
    B, H, W, C = features_nhwc.shape
    HW = H * W
    assert HW == head.spatial_size, "head params were prepared for a different spatial size"
    assert C == head.w.shape[0], "head params were prepared for a different feature dim"
    n_pad = head.w.shape[1]

    feat = features_nhwc.reshape(B, HW, C)  # free view, no transpose

    per_sample_bytes = HW * C * feat.dtype.itemsize
    tb = batch_tile if batch_tile is not None else _pick_batch_tile(B, per_sample_bytes)
    assert B % tb == 0, "batch_tile must divide the batch"
    assert tb % 8 == 0 or tb == B, "batch_tile must be a multiple of 8 or the full batch"
    grid = (B // tb,)

    # VMEM budget: double-buffered feature + output tiles, resident weights,
    # the per-chunk f32 slice + f32 pooled accumulator, plus headroom.
    chunk = min(8, HW)
    feat_tile = tb * HW * C * feat.dtype.itemsize
    out_tile = tb * n_pad * 4
    scratch = tb * chunk * C * 4 + tb * C * 4
    weights = head.w.size * head.w.dtype.itemsize + head.b.size * 4
    vmem_limit = int(2 * feat_tile + 2 * out_tile + scratch + weights + (4 << 20))
    vmem_limit = max(vmem_limit, 16 << 20)

    cost = pl.CostEstimate(
        flops=B * HW * C + 2 * B * C * n_pad,
        transcendentals=0,
        bytes_accessed=feat.size * feat.dtype.itemsize + weights + B * n_pad * 4,
    )

    fused_logits = pl.pallas_call(
        _mtl_head_kernel,
        out_shape=jax.ShapeDtypeStruct((B, n_pad), jnp.float32),
        grid=grid,
        in_specs=[
            pl.BlockSpec((tb, HW, C), lambda b: (b, 0, 0)),
            pl.BlockSpec((C, n_pad), lambda b: (0, 0)),
            pl.BlockSpec((1, n_pad), lambda b: (0, 0)),
        ],
        out_specs=pl.BlockSpec((tb, n_pad), lambda b: (b, 0)),
        compiler_params=pltpu.CompilerParams(
            dimension_semantics=("parallel",),
            vmem_limit_bytes=vmem_limit),
        cost_estimate=cost,
    )(feat, head.w, head.b)

    domain_preds = fused_logits[:, :head.n_dom]
    category_preds = fused_logits[:, head.n_dom:head.n_dom + head.n_cat]
    return domain_preds, category_preds


# --------------------------------------------------------------------------- #
# Param init (matches nn.Linear default: uniform +/- 1/sqrt(fan_in))
# --------------------------------------------------------------------------- #
def init_params(key, feature_dim=FEATURE_DIM,
                num_domains=NUM_DOMAINS, num_categories=NUM_CATEGORIES):
    k1, k2, k3, k4 = jax.random.split(key, 4)
    bound = 1.0 / jnp.sqrt(jnp.float32(feature_dim))
    w_dom = jax.random.uniform(k1, (num_domains, feature_dim),
                               jnp.float32, -bound, bound)
    b_dom = jax.random.uniform(k2, (num_domains,), jnp.float32, -bound, bound)
    w_cat = jax.random.uniform(k3, (num_categories, feature_dim),
                               jnp.float32, -bound, bound)
    b_cat = jax.random.uniform(k4, (num_categories,), jnp.float32, -bound, bound)
    return w_dom, b_dom, w_cat, b_cat


if __name__ == "__main__":
    key = jax.random.PRNGKey(0)
    k_feat, k_params = jax.random.split(key)

    # Small synthetic backbone output: B=2, C=352 (efficientnet_b2 last stage),
    # spatial 8x8 — channels-last + bf16, as the backbone would emit.
    B, H, W, C = 2, 8, 8, FEATURE_DIM
    features = jax.random.normal(k_feat, (B, H, W, C), jnp.float32)
    features_bf16 = features.astype(jnp.bfloat16)

    w_dom, b_dom, w_cat, b_cat = init_params(k_params)
    head = prepare_head_params(w_dom, b_dom, w_cat, b_cat, spatial_size=H * W)

    dom_preds, cat_preds = multitask_heads(features_bf16, head)
    jax.block_until_ready((dom_preds, cat_preds))

    # Plain-JAX reference of the same forward math (from the same bf16 features).
    pooled_ref = jnp.mean(features_bf16.astype(jnp.float32), axis=(1, 2))  # (B, C)
    dom_ref = pooled_ref @ w_dom.T + b_dom
    cat_ref = pooled_ref @ w_cat.T + b_cat

    assert dom_preds.shape == (B, NUM_DOMAINS)
    assert cat_preds.shape == (B, NUM_CATEGORIES)
    # Tolerance covers the deliberate bf16 weight / bf16-pooled MXU path.
    assert jnp.allclose(dom_preds, dom_ref, atol=1e-2, rtol=1e-2)
    assert jnp.allclose(cat_preds, cat_ref, atol=1e-2, rtol=1e-2)

    print("KERNEL_OK")
</pallas_src>

<mosaic_0001>
module attributes {stable_mosaic.version = 11 : i64} {
  func.func @_mtl_head_kernel(%arg0: i32, %arg1: memref<2x64x352xbf16, #tpu.memory_space<vmem>>, %arg2: memref<352x128xbf16, #tpu.memory_space<vmem>>, %arg3: memref<1x128xf32, #tpu.memory_space<vmem>>, %arg4: memref<2x128xf32, #tpu.memory_space<vmem>>) attributes {dimension_semantics = [#tpu.dimension_semantics<parallel>], iteration_bounds = array<i64: 1>, scalar_prefetch = 0 : i64, scratch_operands = 0 : i64, tpu.core_type = #tpu.core_type<tc>, window_params = [{transform_indices = @transform_0, window_bounds = array<i64: 2, 64, 352>}, {pipeline_mode = #tpu.pipeline_mode<synchronous>, transform_indices = @transform_1, window_bounds = array<i64: 352, 128>}, {pipeline_mode = #tpu.pipeline_mode<synchronous>, transform_indices = @transform_2, window_bounds = array<i64: 1, 128>}, {transform_indices = @transform_3, window_bounds = array<i64: 2, 128>}]} {
    %cst = arith.constant 0.000000e+00 : f32
    %0 = vector.broadcast %cst : f32 to vector<2x352xf32>
    %c0_i32 = arith.constant 0 : i32
    %c8_i32 = arith.constant 8 : i32
    %1 = arith.addi %c0_i32, %c8_i32 : i32
    %c1_i32 = arith.constant 1 : i32
    %2 = scf.for %arg5 = %c0_i32 to %1 step %c1_i32 iter_args(%arg6 = %0) -> (vector<2x352xf32>)  : i32 {
      %c8_i32_7 = arith.constant 8 : i32
      %10 = arith.muli %arg5, %c8_i32_7 : i32
      %11 = tpu.assume_multiple %10, 8 : i32
      %c0_8 = arith.constant 0 : index
      %12 = arith.index_cast %11 : i32 to index
      %c0_9 = arith.constant 0 : index
      %13 = vector.load %arg1[%c0_8, %12, %c0_9] : memref<2x64x352xbf16, #tpu.memory_space<vmem>>, vector<2x8x352xbf16>
      %14 = arith.extf %13 : vector<2x8x352xbf16> to vector<2x8x352xf32>
      %cst_10 = arith.constant dense<0.000000e+00> : vector<2x352xf32>
      %15 = vector.multi_reduction <add>, %14, %cst_10 [1] : vector<2x8x352xf32> to vector<2x352xf32>
      %16 = arith.addf %arg6, %15 : vector<2x352xf32>
      scf.yield %16 : vector<2x352xf32>
    }
    %c8_i32_0 = arith.constant 8 : i32
    %3 = arith.truncf %2 : vector<2x352xf32> to vector<2x352xbf16>
    %c0 = arith.constant 0 : index
    %c0_1 = arith.constant 0 : index
    %4 = vector.load %arg2[%c0, %c0_1] : memref<352x128xbf16, #tpu.memory_space<vmem>>, vector<352x128xbf16>
    %cst_2 = arith.constant dense<0.000000e+00> : vector<2x128xf32>
    %5 = tpu.matmul %3, %4, %cst_2 {dimension_numbers = #tpu.dot_dimension_numbers<[1], [0], [0], [1], [0, 0, 1, 1], [], []>} : vector<2x352xbf16>, vector<352x128xbf16>, vector<2x128xf32> -> vector<2x128xf32>
    %c0_3 = arith.constant 0 : index
    %c0_4 = arith.constant 0 : index
    %6 = vector.load %arg3[%c0_3, %c0_4] : memref<1x128xf32, #tpu.memory_space<vmem>>, vector<1x128xf32>
    %7 = vector.broadcast %6 : vector<1x128xf32> to vector<2x128xf32>
    %8 = arith.addf %5, %7 : vector<2x128xf32>
    %c0_5 = arith.constant 0 : index
    %c0_6 = arith.constant 0 : index
    %9 = vector.load %arg4[%c0_5, %c0_6] : memref<2x128xf32, #tpu.memory_space<vmem>>, vector<2x128xf32>
    tpu.vector_store %arg4[%c0_5, %c0_6], %8 {strides = array<i32>} : memref<2x128xf32, #tpu.memory_space<vmem>>, vector<2x128xf32>,
    return
  }
  func.func @transform_0(%arg0: i32) -> (i32, i32, i32) {
    %c0_i32 = arith.constant 0 : i32
    %c0_i32_0 = arith.constant 0 : i32
    %c0_i32_1 = arith.constant 0 : i32
    return %arg0, %c0_i32, %c0_i32_0 : i32, i32, i32
  }
  func.func @transform_1(%arg0: i32) -> (i32, i32) {
    %c0_i32 = arith.constant 0 : i32
    %c0_i32_0 = arith.constant 0 : i32
    %c0_i32_1 = arith.constant 0 : i32
    return %c0_i32, %c0_i32_0 : i32, i32
  }
  func.func @transform_2(%arg0: i32) -> (i32, i32) {
    %c0_i32 = arith.constant 0 : i32
    %c0_i32_0 = arith.constant 0 : i32
    %c0_i32_1 = arith.constant 0 : i32
    return %c0_i32, %c0_i32_0 : i32, i32
  }
  func.func @transform_3(%arg0: i32) -> (i32, i32) {
    %c0_i32 = arith.constant 0 : i32
    %c0_i32_0 = arith.constant 0 : i32
    return %arg0, %c0_i32 : i32, i32
  }
}

</mosaic_0001>

<llo_original>
// kernel: tpu_custom_call.1
$region0: #{tpu_custom_call.1}
  #allocation0 [shape = 'u32[]', space=smem, size = 0x4, offset = 0x4, fixed_abs, tag = 'smem constant byte address 0x4 - core index']
  #allocation1 [shape = 'u32[144,128]{1,0:T(1,128)}', space=vmem, size = 0x12000, scoped, tag = 'internal scratch']
  %s0 = inlined_call_operand.hbm [shape: bf16[2,64,352], index: 0, kind: input, shape index: {}]
  %s1 = inlined_call_operand.hbm [shape: bf16[352,128], index: 1, kind: input, shape index: {}]
  %s2 = inlined_call_operand.vmem [shape: f32[1,128], index: 2, kind: input, shape index: {}]
  %s3 = inlined_call_operand.hbm [shape: f32[2,128], index: 3, kind: output, shape index: {}]
  %s4 = sld [smem:[#allocation0]]
  $region37: #{tpu_custom_call.1} parent=0
    _
  %s6 = ssub.s32 1, %s4
  %s7 = scalar_select 0, %s6, %s4
  $region1: #{tpu_custom_call.1} parent=0
    #allocation2 [shape = 'u8[98304]{0}', space=vmem, size = 0x18000, scoped, tag = 'input window, operand 0, single buffered']
    #allocation3 [shape = 's32[1]{0}', space=sflag, size = 0x4, scoped, tag = 'scoped memory for tpu_custom_call.1']
    #allocation4 [shape = 's32[1]{0}', space=sflag, size = 0x4, scoped, tag = 'scoped memory for tpu_custom_call.1']
    #allocation5 [shape = 'u8[90112]{0}', space=vmem, size = 0x16000, scoped, tag = 'input window, operand 1, single buffered']
    #allocation6 [shape = 's32[1]{0}', space=sflag, size = 0x4, scoped, tag = 'scoped memory for tpu_custom_call.1']
    #allocation7 [shape = 'u8[1024]{0}', space=vmem, size = 0x400, scoped, tag = 'output window, operand 0, single buffered']
    %8 = vsyncpa [#allocation3], 0
    %9 = vsyncpa [#allocation6], 0
    %10 = vsyncpa [#allocation4], 0
    // Predicated region
    $region2: #{tpu_custom_call.1} parent=1 // pred_check
      _
    $region3: #{tpu_custom_call.1} parent=1 // pred_check_branch
      %12 = sbr.rel (0) target = $region5
    $region4: #{tpu_custom_call.1} parent=1 // pred_region
      %s14 = ssub.s32 3072, 3072
      %15 = vsyncadd [#allocation3], %s14
      %s16 = sshll.u32 [#allocation2], 4
      %s17 = int_to_ptr.vmem [resolvable:$true] %s16
      %22 = dma.hbm_to_vmem [thread:$0]  %s0, 3072, %s17, [#allocation3], 192, 192, 12
    $region5: #{tpu_custom_call.1} parent=1 // pred_fallthru
      _
    // Predicated region
    $region6: #{tpu_custom_call.1} parent=1 // pred_check
      _
    $region7: #{tpu_custom_call.1} parent=1 // pred_check_branch
      %24 = sbr.rel (0) target = $region9
    $region8: #{tpu_custom_call.1} parent=1 // pred_region
      %s26 = ssub.s32 2816, 2816
      %27 = vsyncadd [#allocation6], %s26
      %s28 = sshll.u32 [#allocation5], 4
      %s29 = int_to_ptr.vmem [resolvable:$true] %s28
      %34 = dma.hbm_to_vmem [thread:$0]  %s1, 2816, %s29, [#allocation6], 64, 64, 4
    $region9: #{tpu_custom_call.1} parent=1 // pred_fallthru
      _
    // Predicated region
    $region10: #{tpu_custom_call.1} parent=1 // pred_check
      _
    $region11: #{tpu_custom_call.1} parent=1 // pred_check_branch
      %36 = sbr.rel (0) target = $region13
    $region12: #{tpu_custom_call.1} parent=1 // pred_region
      _
    $region13: #{tpu_custom_call.1} parent=1 // pred_fallthru
      _
    // Predicated region
    $region14: #{tpu_custom_call.1} parent=1 // pred_check
      _
    $region15: #{tpu_custom_call.1} parent=1 // pred_check_branch
      %38 = sbr.rel (0) target = $region17
    $region16: #{tpu_custom_call.1} parent=1 // pred_region
      %39 = dma.done [#allocation3], 3072
    $region17: #{tpu_custom_call.1} parent=1 // pred_fallthru
      _
    // Predicated region
    $region18: #{tpu_custom_call.1} parent=1 // pred_check
      _
    $region19: #{tpu_custom_call.1} parent=1 // pred_check_branch
      %41 = sbr.rel (0) target = $region21
    $region20: #{tpu_custom_call.1} parent=1 // pred_region
      %42 = dma.done [#allocation6], 2816
    $region21: #{tpu_custom_call.1} parent=1 // pred_fallthru
      _
    loop: start=0, step=1, limit=8
    $region22: #{tpu_custom_call.1} parent=1 // loop_pre_header
      _
    $region23: #{tpu_custom_call.1} parent=1 // loop_header
      %s45 = sphi 0, %s49
      %p46 = scmp.ge.s32.totalorder %s45, 8
      %v50 = vphi 0.0, %v111
      %v51 = vphi 0.0, %v112
      %v52 = vphi 0.0, %v113
      %v53 = vphi 0.0, %v114
      %v54 = vphi 0.0, %v115
      %v55 = vphi 0.0, %v116
    $region24: #{tpu_custom_call.1} parent=1 // loop_header_branch
      %48 = sbr.rel (%p46) target = $region28
    $region25: #{tpu_custom_call.1} parent=1 // loop_body
      %s56 = smul.u32 %s45, 8
      %s57 = sshra.s32 %s56, 3
      %s58 = sand.u32 %s56, 7
      %s59 = smul.u32 %s57, 3
      %s60 = smul.addr %s59, 4
      %s61 = scalar_lea.vmem [#allocation2], %s60
      %v62 = vld [vmem:[%s61] sm:$0xff]
      %v63 = vld [vmem:[%s61 + $0x8] sm:$0xf]
      %v64 = vld [vmem:[%s61 + $0x60] sm:$0xff]
      %v65 = vld [vmem:[%s61 + $0x68] sm:$0xf]
      %v66 = vunpack.c.l.bf16 %v62
      %v67 = vunpack.c.h.bf16 %v62
      %v68 = vunpack.c.l.bf16 %v63
      %v69 = vunpack.c.l.bf16 %v64
      %v70 = vunpack.c.h.bf16 %v64
      %v71 = vunpack.c.l.bf16 %v65
      %v72 = vrot.slane %v66, 4
      %v73 = vadd.f32 %v66, %v72
      %v74 = vrot.slane %v73, 2
      %v75 = vadd.f32 %v73, %v74
      %v76 = vrot.slane %v75, 1
      %v77 = vadd.f32 %v75, %v76
      %v78 = vrot.slane %v67, 4
      %v79 = vadd.f32 %v67, %v78
      %v80 = vrot.slane %v79, 2
      %v81 = vadd.f32 %v79, %v80
      %v82 = vrot.slane %v81, 1
      %v83 = vadd.f32 %v81, %v82
      %vm84 = vcmask 785408
      %v85 = vsel %vm84, %v68, 0.0
      %v86 = vrot.slane %v85, 4
      %v87 = vadd.f32 %v85, %v86
      %v88 = vrot.slane %v87, 2
      %v89 = vadd.f32 %v87, %v88
      %v90 = vrot.slane %v89, 1
      %v91 = vadd.f32 %v89, %v90
      %v92 = vrot.slane %v69, 4
      %v93 = vadd.f32 %v69, %v92
      %v94 = vrot.slane %v93, 2
      %v95 = vadd.f32 %v93, %v94
      %v96 = vrot.slane %v95, 1
      %v97 = vadd.f32 %v95, %v96
      %v98 = vrot.slane %v70, 4
      %v99 = vadd.f32 %v70, %v98
      %v100 = vrot.slane %v99, 2
      %v101 = vadd.f32 %v99, %v100
      %v102 = vrot.slane %v101, 1
      %v103 = vadd.f32 %v101, %v102
      %v104 = vsel %vm84, %v71, 0.0
      %v105 = vrot.slane %v104, 4
      %v106 = vadd.f32 %v104, %v105
      %v107 = vrot.slane %v106, 2
      %v108 = vadd.f32 %v106, %v107
      %v109 = vrot.slane %v108, 1
      %v110 = vadd.f32 %v108, %v109
      %v111 = vadd.f32 %v50, %v77
      %v112 = vadd.f32 %v51, %v83
      %v113 = vadd.f32 %v52, %v91
      %v114 = vadd.f32 %v53, %v97
      %v115 = vadd.f32 %v54, %v103
      %v116 = vadd.f32 %v55, %v110
    $region26: #{tpu_custom_call.1} parent=1 // loop_footer
      %s49 = sadd.s32 1, %s45
    $region27: #{tpu_custom_call.1} parent=1 // loop_footer_branch
      %44 = sbr.rel target = $region23
    $region28: #{tpu_custom_call.1} parent=1 // loop_exit
      _
    %v117 = vpack.c.bf16 %v50, %v50
    %v118 = vpack.c.bf16 %v51, %v51
    %v119 = vpack.c.bf16 %v52, %v52
    %v120 = vpack.c.bf16 %v53, %v53
    %v121 = vpack.c.bf16 %v54, %v54
    %v122 = vpack.c.bf16 %v55, %v55
    %v123 = vld [vmem:[#allocation5] sm:$0xf]
    %v124 = vld [vmem:[#allocation5 + $0x4] sm:$0xf]
    %v125 = vld [vmem:[#allocation5 + $0x8] sm:$0xf]
    %v126 = vld [vmem:[#allocation5 + $0xc] sm:$0xf]
    %v127 = vld [vmem:[#allocation5 + $0x10] sm:$0xf]
    %v128 = vld [vmem:[#allocation5 + $0x14] sm:$0xf]
    %v129 = vld [vmem:[#allocation5 + $0x18] sm:$0xf]
    %v130 = vld [vmem:[#allocation5 + $0x1c] sm:$0xf]
    %v131 = vld [vmem:[#allocation5 + $0x20] sm:$0xf]
    %v132 = vld [vmem:[#allocation5 + $0x24] sm:$0xf]
    %v133 = vld [vmem:[#allocation5 + $0x28] sm:$0xf]
    %v134 = vld [vmem:[#allocation5 + $0x2c] sm:$0xf]
    %v135 = vld [vmem:[#allocation5 + $0x30] sm:$0xf]
    %v136 = vld [vmem:[#allocation5 + $0x34] sm:$0xf]
    %v137 = vld [vmem:[#allocation5 + $0x38] sm:$0xf]
    %v138 = vld [vmem:[#allocation5 + $0x3c] sm:$0xf]
    %v139 = vld [vmem:[#allocation5 + $0x40] sm:$0xf]
    %v140 = vld [vmem:[#allocation5 + $0x44] sm:$0xf]
    %v141 = vld [vmem:[#allocation5 + $0x48] sm:$0xf]
    %v142 = vld [vmem:[#allocation5 + $0x4c] sm:$0xf]
    %v143 = vld [vmem:[#allocation5 + $0x50] sm:$0xf]
    %v144 = vld [vmem:[#allocation5 + $0x54] sm:$0xf]
    %v145 = vld [vmem:[#allocation5 + $0x58] sm:$0xf]
    %v146 = vld [vmem:[#allocation5 + $0x5c] sm:$0xf]
    %v147 = vld [vmem:[#allocation5 + $0x60] sm:$0xf]
    %v148 = vld [vmem:[#allocation5 + $0x64] sm:$0xf]
    %v149 = vld [vmem:[#allocation5 + $0x68] sm:$0xf]
    %v150 = vld [vmem:[#allocation5 + $0x6c] sm:$0xf]
    %v151 = vld [vmem:[#allocation5 + $0x70] sm:$0xf]
    %v152 = vld [vmem:[#allocation5 + $0x74] sm:$0xf]
    %v153 = vld [vmem:[#allocation5 + $0x78] sm:$0xf]
    %v154 = vld [vmem:[#allocation5 + $0x7c] sm:$0xf]
    %v155 = vld [vmem:[#allocation5 + $0x80] sm:$0xf]
    %v156 = vld [vmem:[#allocation5 + $0x84] sm:$0xf]
    %v157 = vld [vmem:[#allocation5 + $0x88] sm:$0xf]
    %v158 = vld [vmem:[#allocation5 + $0x8c] sm:$0xf]
    %v159 = vld [vmem:[#allocation5 + $0x90] sm:$0xf]
    %v160 = vld [vmem:[#allocation5 + $0x94] sm:$0xf]
    %v161 = vld [vmem:[#allocation5 + $0x98] sm:$0xf]
    %v162 = vld [vmem:[#allocation5 + $0x9c] sm:$0xf]
    %v163 = vld [vmem:[#allocation5 + $0xa0] sm:$0xf]
    %v164 = vld [vmem:[#allocation5 + $0xa4] sm:$0xf]
    %v165 = vld [vmem:[#allocation5 + $0xa8] sm:$0xf]
    %v166 = vld [vmem:[#allocation5 + $0xac] sm:$0xf]
    %v167 = vld [vmem:[%s2] sm:$0x1]
    %v169 = vlaneseq
    %v170 = vshrl.u32 %v169, 7
    %v171 = vsub.s32 0, %v170
    %v172 = vrot.slane %v167, %v171
    %v180 = vunpack.c.l.b16 %v117
    %v181 = vunpack.c.l.b16 %v118
    %v182 = vunpack.c.l.b16 %v119
    %v183 = vunpack.c.l.b16 %v120
    %v184 = vunpack.c.l.b16 %v121
    %v185 = vunpack.c.l.b16 %v122
    %vm186 = vcmask 1041409
    %v187 = vsel %vm186, %v183, %v180
    %v188 = vsel %vm186, %v184, %v181
    %v189 = vsel %vm186, %v185, %v182
    %v190 = vpack.c.b16 %v187, %v187
    %v191 = vpack.c.b16 %v188, %v188
    %v192 = vpack.c.b16 %v189, %v189
    %v239 = vunpack.c.l.b16 %v123
    %v240 = vunpack.c.l.b16 %v124
    %v241 = vunpack.c.l.b16 %v125
    %v242 = vunpack.c.l.b16 %v126
    %v243 = vunpack.c.l.b16 %v127
    %v244 = vunpack.c.l.b16 %v128
    %v245 = vunpack.c.l.b16 %v129
    %v246 = vunpack.c.l.b16 %v130
    %v247 = vunpack.c.l.b16 %v131
    %v248 = vunpack.c.l.b16 %v132
    %v249 = vunpack.c.l.b16 %v133
    %v250 = vunpack.c.l.b16 %v134
    %v251 = vunpack.c.l.b16 %v135
    %v252 = vunpack.c.l.b16 %v136
    %v253 = vunpack.c.l.b16 %v137
    %v254 = vunpack.c.l.b16 %v138
    %v255 = vunpack.c.l.b16 %v139
    %v256 = vunpack.c.l.b16 %v140
    %v257 = vunpack.c.l.b16 %v141
    %v258 = vunpack.c.l.b16 %v142
    %v259 = vunpack.c.l.b16 %v143
    %v260 = vunpack.c.l.b16 %v144
    %v261 = vunpack.c.l.b16 %v145
    %v262 = vunpack.c.l.b16 %v146
    %v263 = vunpack.c.l.b16 %v147
    %v264 = vunpack.c.l.b16 %v148
    %v265 = vunpack.c.l.b16 %v149
    %v266 = vunpack.c.l.b16 %v150
    %v267 = vunpack.c.l.b16 %v151
    %v268 = vunpack.c.l.b16 %v152
    %v269 = vunpack.c.l.b16 %v153
    %v270 = vunpack.c.l.b16 %v154
    %v271 = vunpack.c.l.b16 %v155
    %v272 = vunpack.c.l.b16 %v156
    %v273 = vunpack.c.l.b16 %v157
    %v274 = vunpack.c.l.b16 %v158
    %v275 = vunpack.c.l.b16 %v159
    %v276 = vunpack.c.l.b16 %v160
    %v277 = vunpack.c.l.b16 %v161
    %v278 = vunpack.c.l.b16 %v162
    %v279 = vunpack.c.l.b16 %v163
    %v280 = vunpack.c.l.b16 %v164
    %v281 = vunpack.c.l.b16 %v165
    %v282 = vunpack.c.l.b16 %v166
    %v283 = vpack.c.b16 %v240, %v239
    %v284 = vpack.c.b16 %v242, %v241
    %v285 = vpack.c.b16 %v244, %v243
    %v286 = vpack.c.b16 %v246, %v245
    %v287 = vpack.c.b16 %v248, %v247
    %v288 = vpack.c.b16 %v250, %v249
    %v289 = vpack.c.b16 %v252, %v251
    %v290 = vpack.c.b16 %v254, %v253
    %v291 = vpack.c.b16 %v256, %v255
    %v292 = vpack.c.b16 %v258, %v257
    %v293 = vpack.c.b16 %v260, %v259
    %v294 = vpack.c.b16 %v262, %v261
    %v295 = vpack.c.b16 %v264, %v263
    %v296 = vpack.c.b16 %v266, %v265
    %v297 = vpack.c.b16 %v268, %v267
    %v298 = vpack.c.b16 %v270, %v269
    %v299 = vpack.c.b16 %v272, %v271
    %v300 = vpack.c.b16 %v274, %v273
    %v301 = vpack.c.b16 %v276, %v275
    %v302 = vpack.c.b16 %v278, %v277
    %v303 = vpack.c.b16 %v280, %v279
    %v304 = vpack.c.b16 %v282, %v281
    %vm327 = vcmask 785408
    %v329 = vsel %vm327, %v192, 0
    %331 = vmatprep.subr.bf16.mxu0 0
    %332 = vmatpush1.bf16.msra.mxu0 %v283
    %333 = vmatprep.subr.bf16.mxu0 0
    %334 = vmatpush1.bf16.msra.mxu0 %v284
    %335 = vmatprep.subr.bf16.mxu0 0
    %336 = vmatpush1.bf16.msra.mxu0 %v285
    %337 = vmatprep.subr.bf16.mxu0 0
    %338 = vmatpush1.bf16.msra.mxu0 %v286
    %339 = vmatprep.subr.bf16.mxu0 0
    %340 = vmatpush1.bf16.msra.mxu0 %v287
    %341 = vmatprep.subr.bf16.mxu0 0
    %342 = vmatpush1.bf16.msra.mxu0 %v288
    %343 = vmatprep.subr.bf16.mxu0 0
    %344 = vmatpush1.bf16.msra.mxu0 %v289
    %345 = vmatprep.subr.bf16.mxu0 0
    %346 = vmatpush1.bf16.msra.mxu0 %v290
    %347 = vmatprep.subr.bf16.mxu0 0
    %348 = vmatpush1.bf16.msra.mxu0 %v291
    %349 = vmatprep.subr.bf16.mxu0 0
    %350 = vmatpush1.bf16.msra.mxu0 %v292
    %351 = vmatprep.subr.bf16.mxu0 0
    %352 = vmatpush1.bf16.msra.mxu0 %v293
    %353 = vmatprep.subr.bf16.mxu0 0
    %354 = vmatpush1.bf16.msra.mxu0 %v294
    %355 = vmatprep.subr.bf16.mxu0 0
    %356 = vmatpush1.bf16.msra.mxu0 %v295
    %357 = vmatprep.subr.bf16.mxu0 0
    %358 = vmatpush1.bf16.msra.mxu0 %v296
    %359 = vmatprep.subr.bf16.mxu0 0
    %360 = vmatpush1.bf16.msra.mxu0 %v297
    %361 = vmatprep.subr.bf16.mxu0 0
    %362 = vmatpush1.bf16.msra.mxu0 %v298
    %363 = vmatprep.mubr.bf16.mxu0 %v191
    %364 = vmatmul.mubr.bf16.gmra.mrb[0].mxu0 %v190
    %v365 = vpop.f32.mrb[0].mxu0
    %v366 = vadd.f32 %v172, %v365
    %v367 = vpop.f32.mrb[0].mxu0
    %v368 = vpop.f32.mrb[0].mxu0
    %v369 = vpop.f32.mrb[0].mxu0
    %370 = vdwg.mxu0
    %371 = vmatprep.subr.bf16.mxu0 0
    %372 = vmatpush1.bf16.msra.mxu0 %v299
    %373 = vmatprep.subr.bf16.mxu0 0
    %374 = vmatpush1.bf16.msra.mxu0 %v300
    %375 = vmatprep.subr.bf16.mxu0 0
    %376 = vmatpush1.bf16.msra.mxu0 %v301
    %377 = vmatprep.subr.bf16.mxu0 0
    %378 = vmatpush1.bf16.msra.mxu0 %v302
    %379 = vmatprep.subr.bf16.mxu0 0
    %380 = vmatpush1.bf16.msra.mxu0 %v303
    %381 = vmatprep.subr.bf16.mxu0 0
    %382 = vmatpush1.bf16.msra.mxu0 %v304
    %383 = vmatprep.subr.bf16.mxu0 0
    %384 = vmatpush1.bf16.msra.mxu0 0
    %385 = vmatprep.subr.bf16.mxu0 0
    %386 = vmatpush1.bf16.msra.mxu0 0
    %387 = vmatprep.subr.bf16.mxu0 0
    %388 = vmatpush1.bf16.msra.mxu0 0
    %389 = vmatprep.subr.bf16.mxu0 0
    %390 = vmatpush1.bf16.msra.mxu0 0
    %391 = vmatprep.subr.bf16.mxu0 0
    %392 = vmatpush1.bf16.msra.mxu0 0
    %393 = vmatprep.subr.bf16.mxu0 0
    %394 = vmatpush1.bf16.msra.mxu0 0
    %395 = vmatprep.subr.bf16.mxu0 0
    %396 = vmatpush1.bf16.msra.mxu0 0
    %397 = vmatprep.subr.bf16.mxu0 0
    %398 = vmatpush1.bf16.msra.mxu0 0
    %399 = vmatprep.subr.bf16.mxu0 0
    %400 = vmatpush1.bf16.msra.mxu0 0
    %401 = vmatprep.subr.bf16.mxu0 0
    %402 = vmatpush1.bf16.msra.mxu0 0
    %403 = vmatprep.mubr.bf16.mxu0 0
    %404 = vmatmul.mubr.bf16.gmra.mrb[0].mxu0 %v329
    %v405 = vpop.f32.mrb[0].mxu0
    %v406 = vadd.f32 %v366, %v405
    %v407 = vpop.f32.mrb[0].mxu0
    %v408 = vpop.f32.mrb[0].mxu0
    %v409 = vpop.f32.mrb[0].mxu0
    %410 = vdwg.mxu0
    %411 = vst [vmem:[#allocation7] sm:$0x3] %v406
    // Predicated region
    $region29: #{tpu_custom_call.1} parent=1 // pred_check
      _
    $region30: #{tpu_custom_call.1} parent=1 // pred_check_branch
      %413 = sbr.rel (0) target = $region32
    $region31: #{tpu_custom_call.1} parent=1 // pred_region
      %s415 = ssub.s32 32, 32
      %416 = vsyncadd [#allocation4], %s415
      %s418 = sshll.u32 [#allocation7], 4
      %s419 = int_to_ptr.vmem [resolvable:$true] %s418
      %421 = dma.vmem_to_hbm [thread:$0]  %s419, 32, %s3, [#allocation4]
    $region32: #{tpu_custom_call.1} parent=1 // pred_fallthru
      _
    // Predicated region
    $region33: #{tpu_custom_call.1} parent=1 // pred_check
      _
    $region34: #{tpu_custom_call.1} parent=1 // pred_check_branch
      %423 = sbr.rel (0) target = $region36
    $region35: #{tpu_custom_call.1} parent=1 // pred_region
      %424 = dma.done [#allocation4], 32
    $region36: #{tpu_custom_call.1} parent=1 // pred_fallthru
      _
    %425 = vsyncpa [#allocation3], 1
    %426 = vsyncpa [#allocation6], 1
    %427 = vsyncpa [#allocation4], 1

</llo_original>
